<compile_context>
chip_gen: v6e
topology: v6e:2x2x1
jax: 0.10.0
libtpu: 0.0.40
codegen_flags: <defaults>
</compile_context>

<pallas_src>
import functools

import jax
import jax.numpy as jnp
from jax.experimental import pallas as pl
from jax.experimental.pallas import tpu as pltpu

_LANE = 128
# Per-input-block byte budget (per pipeline buffer). Chosen so the
# double-buffered footprint stays under every generation's scoped-VMEM default.
_BLOCK_BYTES = 2 * 1024 * 1024


def _iou_loss_kernel(pred_ref, tgt_ref, out_ref, iand_acc, sum_acc, *,
                     rows, block_rows, needs_mask):
    """Grid = (batch-block i, inner-k). Per-lane partial sums in VMEM scratch."""
    k = pl.program_id(1)
    last = pl.num_programs(1) - 1

    @pl.when(k == 0)
    def _():
        iand_acc[...] = jnp.zeros_like(iand_acc)
        sum_acc[...] = jnp.zeros_like(sum_acc)

    def accum(mask_rows):
        # Cast in-register (VPU cast hides under the DMA); inputs may be bf16.
        p = pred_ref[...].astype(jnp.float32)   # (bb, block_rows, 128)
        t = tgt_ref[...].astype(jnp.float32)
        if mask_rows:
            # Last inner tile may read past `rows` (unspecified contents):
            # zero both operands before use (narrow column iota, broadcast).
            row_ids = jax.lax.broadcasted_iota(jnp.int32, (1, block_rows, 1), 1)
            valid = (k * block_rows + row_ids) < rows
            p = jnp.where(valid, p, 0.0)
            t = jnp.where(valid, t, 0.0)
        # Fused reductions: iand = sum(p*t); sum(p) + sum(t) == sum(p + t).
        # Keep the lane axis: reduce sublanes here, cross-lane in the epilogue.
        iand_acc[...] += jnp.sum(p * t, axis=1)   # (bb, 128)
        sum_acc[...] += jnp.sum(p + t, axis=1)    # (bb, 128)

    if needs_mask:
        # Mask off the hot path: only the final (partial) tile pays for it.
        @pl.when(k < last)
        def _():
            accum(False)

        @pl.when(k == last)
        def _():
            accum(True)
    else:
        accum(False)

    @pl.when(k == last)
    def _():
        iand = jnp.sum(iand_acc[...], axis=1, keepdims=True)    # (bb, 1)
        total = jnp.sum(sum_acc[...], axis=1, keepdims=True)    # (bb, 1)
        ior = total - iand
        # Matches the PyTorch reference (no eps guard; ior == 0 -> NaN/Inf).
        per_sample = 1.0 - iand / ior                            # (bb, 1)
        out_ref[...] = per_sample.reshape(out_ref.shape).astype(out_ref.dtype)


def iou_loss(pred, target):
    """Pallas TPU implementation of IoU_loss.forward(pred, target).

    pred, target: arrays of shape [B, C, H, W] (NCHW), any float dtype.
    Returns a scalar float32: mean over batch of (1 - IoU).
    """
    assert pred.shape == target.shape
    b = pred.shape[0]
    n = 1
    for d in pred.shape[1:]:
        n *= d

    pred_f = pred.reshape(b, n)
    tgt_f = target.reshape(b, n)

    # Pad the flat axis only when it is not lane-aligned (rare). Zero padding
    # is sum-neutral, so iand / ior are unchanged.
    pad = (-n) % _LANE
    if pad:
        pred_f = jnp.pad(pred_f, ((0, 0), (0, pad)))
        tgt_f = jnp.pad(tgt_f, ((0, 0), (0, pad)))
    rows = (n + pad) // _LANE
    pred_f = pred_f.reshape(b, rows, _LANE)
    tgt_f = tgt_f.reshape(b, rows, _LANE)

    itemsize = max(jnp.dtype(pred_f.dtype).itemsize,
                   jnp.dtype(tgt_f.dtype).itemsize)
    bytes_per_sample = rows * _LANE * itemsize

    if bytes_per_sample > _BLOCK_BYTES:
        # Large samples: one sample per step, tile the flattened axis with a
        # dtype-aware row count (constant bytes per DMA across dtypes).
        bb = 1
        block_rows = max(8, (_BLOCK_BYTES // (_LANE * itemsize)) // 8 * 8)
        if block_rows >= rows:
            block_rows = rows
        # Note: if b == 1 on v7x, one TC idles; a split-k partial-output
        # variant could recover ~2x there (not needed for typical batches).
    else:
        # Small samples: whole sample per step; pack bb samples per block.
        block_rows = rows
        bb = max(1, min(b, _BLOCK_BYTES // max(1, bytes_per_sample)))
        if b >= 2:
            # Keep >= 2 parallel batch steps so both v7x TensorCores get work.
            bb = min(bb, -(-b // 2))
        # Make bb divide b so no batch tile reads undefined (OOB) samples.
        while b % bb:
            bb -= 1

    kt = pl.cdiv(rows, block_rows)
    needs_mask = (block_rows != rows) and (rows % block_rows != 0)

    kernel = functools.partial(
        _iou_loss_kernel,
        rows=rows,
        block_rows=block_rows,
        needs_mask=needs_mask,
    )

    bytes_in = b * rows * _LANE * (pred_f.dtype.itemsize + tgt_f.dtype.itemsize)
    cost = pl.CostEstimate(
        flops=3 * b * rows * _LANE,
        transcendentals=0,
        bytes_accessed=bytes_in + b * 4,
    )

    per_sample = pl.pallas_call(
        kernel,
        out_shape=jax.ShapeDtypeStruct((b, 1, 1), jnp.float32),
        grid_spec=pltpu.PrefetchScalarGridSpec(
            num_scalar_prefetch=0,
            grid=(b // bb, kt),
            in_specs=[
                pl.BlockSpec((bb, block_rows, _LANE), lambda i, k: (i, k, 0)),
                pl.BlockSpec((bb, block_rows, _LANE), lambda i, k: (i, k, 0)),
            ],
            out_specs=pl.BlockSpec((bb, 1, 1), lambda i, k: (i, 0, 0)),
            scratch_shapes=[
                pltpu.VMEM((bb, _LANE), jnp.float32),   # per-lane iand partials
                pltpu.VMEM((bb, _LANE), jnp.float32),   # per-lane sum(p)+sum(t)
            ],
        ),
        compiler_params=pltpu.CompilerParams(
            dimension_semantics=("parallel", "arbitrary"),
        ),
        cost_estimate=cost,
    )(pred_f, tgt_f)

    # Mean over batch in the wrapper (divide-by-B kept out of the kernel).
    return jnp.mean(per_sample)


def _iou_loss_ref(pred, target):
    # Pure-JAX reference mirroring the PyTorch loop.
    b = pred.shape[0]
    iou = 0.0
    for i in range(b):
        iand = jnp.sum(target[i] * pred[i])
        ior = jnp.sum(target[i]) + jnp.sum(pred[i]) - iand
        iou = iou + (1.0 - iand / ior)
    return iou / b


if __name__ == "__main__":
    key = jax.random.PRNGKey(0)
    k1, k2 = jax.random.split(key)
    B, C, H, W = 2, 4, 16, 16
    # Sigmoid-like predictions and binary-ish targets, as in saliency losses.
    pred = jax.nn.sigmoid(jax.random.normal(k1, (B, C, H, W), dtype=jnp.float32))
    target = (jax.random.uniform(k2, (B, C, H, W)) > 0.5).astype(jnp.float32)

    out = iou_loss(pred, target)
    jax.block_until_ready(out)

    ref = _iou_loss_ref(pred, target)
    assert jnp.allclose(out, ref, rtol=1e-5, atol=1e-5), (out, ref)
    print("KERNEL_OK")
</pallas_src>

<mosaic_0001>
module attributes {stable_mosaic.version = 11 : i64} {
  func.func @_iou_loss_kernel(%arg0: i32, %arg1: i32, %arg2: memref<1x8x128xf32, #tpu.memory_space<vmem>>, %arg3: memref<1x8x128xf32, #tpu.memory_space<vmem>>, %arg4: memref<1x1x1xf32, #tpu.memory_space<vmem>>, %arg5: memref<1x128xf32, #tpu.memory_space<vmem>>, %arg6: memref<1x128xf32, #tpu.memory_space<vmem>>) attributes {dimension_semantics = [#tpu.dimension_semantics<parallel>, #tpu.dimension_semantics<arbitrary>], iteration_bounds = array<i64: 2, 1>, scalar_prefetch = 0 : i64, scratch_operands = 2 : i64, tpu.core_type = #tpu.core_type<tc>, window_params = [{transform_indices = @transform_0, window_bounds = array<i64: 1, 8, 128>}, {transform_indices = @transform_1, window_bounds = array<i64: 1, 8, 128>}, {transform_indices = @transform_2, window_bounds = array<i64: 1, 1, 1>}]} {
    %c0_i32 = arith.constant 0 : i32
    %0 = arith.cmpi eq, %arg1, %c0_i32 : i32
    %1 = arith.extui %0 : i1 to i32
    %c0_i32_0 = arith.constant 0 : i32
    %2 = arith.cmpi ne, %1, %c0_i32_0 : i32
    scf.if %2 {
      %cst_17 = arith.constant 0.000000e+00 : f32
      %18 = vector.broadcast %cst_17 : f32 to vector<1x128xf32>
      %c0_18 = arith.constant 0 : index
      %c0_19 = arith.constant 0 : index
      %19 = vector.load %arg5[%c0_18, %c0_19] : memref<1x128xf32, #tpu.memory_space<vmem>>, vector<1x128xf32>
      tpu.vector_store %arg5[%c0_18, %c0_19], %18 {strides = array<i32>} : memref<1x128xf32, #tpu.memory_space<vmem>>, vector<1x128xf32>,
      %cst_20 = arith.constant 0.000000e+00 : f32
      %20 = vector.broadcast %cst_20 : f32 to vector<1x128xf32>
      %c0_21 = arith.constant 0 : index
      %c0_22 = arith.constant 0 : index
      %21 = vector.load %arg6[%c0_21, %c0_22] : memref<1x128xf32, #tpu.memory_space<vmem>>, vector<1x128xf32>
      tpu.vector_store %arg6[%c0_21, %c0_22], %20 {strides = array<i32>} : memref<1x128xf32, #tpu.memory_space<vmem>>, vector<1x128xf32>,
    } else {
    }
    %c0 = arith.constant 0 : index
    %c0_1 = arith.constant 0 : index
    %c0_2 = arith.constant 0 : index
    %3 = vector.load %arg2[%c0, %c0_1, %c0_2] : memref<1x8x128xf32, #tpu.memory_space<vmem>>, vector<1x8x128xf32>
    %c0_3 = arith.constant 0 : index
    %c0_4 = arith.constant 0 : index
    %c0_5 = arith.constant 0 : index
    %4 = vector.load %arg3[%c0_3, %c0_4, %c0_5] : memref<1x8x128xf32, #tpu.memory_space<vmem>>, vector<1x8x128xf32>
    %c0_6 = arith.constant 0 : index
    %c0_7 = arith.constant 0 : index
    %5 = vector.load %arg5[%c0_6, %c0_7] : memref<1x128xf32, #tpu.memory_space<vmem>>, vector<1x128xf32>
    %6 = arith.mulf %3, %4 : vector<1x8x128xf32>
    %cst = arith.constant dense<0.000000e+00> : vector<1x128xf32>
    %7 = vector.multi_reduction <add>, %6, %cst [1] : vector<1x8x128xf32> to vector<1x128xf32>
    %8 = arith.addf %5, %7 : vector<1x128xf32>
    %c0_8 = arith.constant 0 : index
    %c0_9 = arith.constant 0 : index
    %9 = vector.load %arg5[%c0_8, %c0_9] : memref<1x128xf32, #tpu.memory_space<vmem>>, vector<1x128xf32>
    tpu.vector_store %arg5[%c0_8, %c0_9], %8 {strides = array<i32>} : memref<1x128xf32, #tpu.memory_space<vmem>>, vector<1x128xf32>,
    %c0_10 = arith.constant 0 : index
    %c0_11 = arith.constant 0 : index
    %10 = vector.load %arg6[%c0_10, %c0_11] : memref<1x128xf32, #tpu.memory_space<vmem>>, vector<1x128xf32>
    %11 = arith.addf %3, %4 : vector<1x8x128xf32>
    %cst_12 = arith.constant dense<0.000000e+00> : vector<1x128xf32>
    %12 = vector.multi_reduction <add>, %11, %cst_12 [1] : vector<1x8x128xf32> to vector<1x128xf32>
    %13 = arith.addf %10, %12 : vector<1x128xf32>
    %c0_13 = arith.constant 0 : index
    %c0_14 = arith.constant 0 : index
    %14 = vector.load %arg6[%c0_13, %c0_14] : memref<1x128xf32, #tpu.memory_space<vmem>>, vector<1x128xf32>
    tpu.vector_store %arg6[%c0_13, %c0_14], %13 {strides = array<i32>} : memref<1x128xf32, #tpu.memory_space<vmem>>, vector<1x128xf32>,
    %c0_i32_15 = arith.constant 0 : i32
    %15 = arith.cmpi eq, %arg1, %c0_i32_15 : i32
    %16 = arith.extui %15 : i1 to i32
    %c0_i32_16 = arith.constant 0 : i32
    %17 = arith.cmpi ne, %16, %c0_i32_16 : i32
    scf.if %17 {
      %c0_17 = arith.constant 0 : index
      %c0_18 = arith.constant 0 : index
      %18 = vector.load %arg5[%c0_17, %c0_18] : memref<1x128xf32, #tpu.memory_space<vmem>>, vector<1x128xf32>
      %cst_19 = arith.constant dense<0.000000e+00> : vector<1xf32>
      %19 = vector.multi_reduction <add>, %18, %cst_19 [1] : vector<1x128xf32> to vector<1xf32>
      %20 = vector.shape_cast %19 : vector<1xf32> to vector<1x1xf32>
      %c0_20 = arith.constant 0 : index
      %c0_21 = arith.constant 0 : index
      %21 = vector.load %arg6[%c0_20, %c0_21] : memref<1x128xf32, #tpu.memory_space<vmem>>, vector<1x128xf32>
      %cst_22 = arith.constant dense<0.000000e+00> : vector<1xf32>
      %22 = vector.multi_reduction <add>, %21, %cst_22 [1] : vector<1x128xf32> to vector<1xf32>
      %23 = vector.shape_cast %22 : vector<1xf32> to vector<1x1xf32>
      %24 = arith.subf %23, %20 : vector<1x1xf32>
      %25 = arith.divf %20, %24 : vector<1x1xf32>
      %cst_23 = arith.constant 1.000000e+00 : f32
      %26 = vector.broadcast %cst_23 : f32 to vector<1x1xf32>
      %27 = arith.subf %26, %25 : vector<1x1xf32>
      %28 = vector.shape_cast %27 : vector<1x1xf32> to vector<1x1x1xf32>
      %c0_24 = arith.constant 0 : index
      %c0_25 = arith.constant 0 : index
      %c0_26 = arith.constant 0 : index
      %29 = vector.load %arg4[%c0_24, %c0_25, %c0_26] : memref<1x1x1xf32, #tpu.memory_space<vmem>>, vector<1x1x1xf32>
      tpu.vector_store %arg4[%c0_24, %c0_25, %c0_26], %28 {strides = array<i32>} : memref<1x1x1xf32, #tpu.memory_space<vmem>>, vector<1x1x1xf32>,
    } else {
    }
    return
  }
  func.func @transform_0(%arg0: i32, %arg1: i32) -> (i32, i32, i32) {
    %c0_i32 = arith.constant 0 : i32
    %c0_i32_0 = arith.constant 0 : i32
    return %arg0, %arg1, %c0_i32 : i32, i32, i32
  }
  func.func @transform_1(%arg0: i32, %arg1: i32) -> (i32, i32, i32) {
    %c0_i32 = arith.constant 0 : i32
    %c0_i32_0 = arith.constant 0 : i32
    return %arg0, %arg1, %c0_i32 : i32, i32, i32
  }
  func.func @transform_2(%arg0: i32, %arg1: i32) -> (i32, i32, i32) {
    %c0_i32 = arith.constant 0 : i32
    %c0_i32_0 = arith.constant 0 : i32
    %c0_i32_1 = arith.constant 0 : i32
    return %arg0, %c0_i32, %c0_i32_0 : i32, i32, i32
  }
}

</mosaic_0001>

<llo_original>
// kernel: tpu_custom_call.1
$region0: #{tpu_custom_call.1}
  #allocation0 [shape = 'u32[]', space=smem, size = 0x4, offset = 0x4, fixed_abs, tag = 'smem constant byte address 0x4 - core index']
  #allocation1 [shape = 'u32[144,128]{1,0:T(1,128)}', space=vmem, size = 0x12000, scoped, tag = 'internal scratch']
  #allocation2 [shape = 'f32[1,128]{1,0:T(1,128)}', space=vmem, size = 0x200, scoped, tag = 'scratch operand']
  #allocation3 [shape = 'f32[1,128]{1,0:T(1,128)}', space=vmem, size = 0x200, scoped, tag = 'scratch operand']
  %s0 = inlined_call_operand.hbm [shape: f32[2,8,128], index: 0, kind: input, shape index: {}]
  %s1 = inlined_call_operand.hbm [shape: f32[2,8,128], index: 1, kind: input, shape index: {}]
  %s2 = inlined_call_operand.vmem [shape: f32[2,1,1], index: 2, kind: output, shape index: {}]
  %s3 = sld [smem:[#allocation0]]
  $region57: #{tpu_custom_call.1} parent=0
    _
  %s5 = ssub.s32 1, %s3
  %s6 = scalar_select 0, %s5, %s3
  $region1: #{tpu_custom_call.1} parent=0
    #allocation4 [shape = 'u8[8192]{0}', space=vmem, size = 0x2000, scoped, tag = 'input window, operand 0']
    #allocation5 [shape = 's32[2]{0}', space=sflag, size = 0x8, scoped, tag = 'scoped memory for tpu_custom_call.1']
    #allocation6 [shape = 'u8[8192]{0}', space=vmem, size = 0x2000, scoped, tag = 'input window, operand 1']
    #allocation7 [shape = 's32[2]{0}', space=sflag, size = 0x8, scoped, tag = 'scoped memory for tpu_custom_call.1']
    %7 = vsyncpa [#allocation5], 0
    %s8 = scalar_lea.sflag [#allocation5], 1
    %9 = vsyncpa %s8, 0
    %10 = vsyncpa [#allocation7], 0
    %s11 = scalar_lea.sflag [#allocation7], 1
    %12 = vsyncpa %s11, 0
    loop: start=0, step=1, limit=4
    $region2: #{tpu_custom_call.1} parent=1 // loop_pre_header
      _
    $region3: #{tpu_custom_call.1} parent=1 // loop_header
      %s14 = sphi 0, %s18
      %p15 = scmp.ge.s32.totalorder %s14, 4
      %s21 = sphi 0, %s33
      %s22 = sphi 0, %s29
      %s23 = sphi 0, %s21
      %s24 = sphi 0, %s22
      %s25 = sphi 0, %s23
      %s26 = sphi 0, %s24
      %s38 = sphi 0, %s40
      %s41 = sphi 0, %s38
      %s42 = sphi 0, %s41
      %s58 = sphi 0, %s42
      %s66 = sphi 0, %s68
      %s69 = sphi 0, %s66
      %s70 = sphi 0, %s69
      %s86 = sphi 0, %s70
      %s92 = sphi 0, %s94
      %s95 = sphi 0, %s92
      %s96 = sphi 0, %s95
      %s112 = sphi 0, %s96
    $region4: #{tpu_custom_call.1} parent=1 // loop_header_branch
      %17 = sbr.rel (%p15) target = $region8
    $region5: #{tpu_custom_call.1} parent=1 // loop_body
      %s19 = ssub.s32 %s14, 1
      %s20 = ssub.s32 %s14, 2
      %s27 = sadd.s32 1, %s22
      %p28 = scmp.ge.s32.totalorder %s27, 1
      %s29 = scalar_select %p28, 0, %s27
      %s30 = sadd.s32 1, %s21
      %s31 = scalar_select %p28, %s30, %s21
      %p32 = scmp.ge.s32.totalorder %s31, 2
      %s33 = scalar_select %p32, 0, %s31
      %s34 = ssub.s32 %s21, %s33
      %s35 = ssub.s32 %s22, %s29
      %s36 = sor.u32 %s34, %s35
      %p37 = scmp.eq.s32.totalorder %s36, 0
      %s39 = sadd.s32 %s38, 1
      %s40 = scalar_select %p37, %s38, %s39
      %p43 = pneg %p37
      %p44 = scmp.eq.s32.totalorder %s14, 1
      %p45 = por %p43, %p44
      %p46 = scmp.ne.s32.totalorder %s38, %s41
      %p47 = scmp.eq.s32.totalorder %s14, 0
      %p48 = por %p46, %p47
      %p49 = scmp.ne.s32.totalorder %s38, %s41
      %p50 = scmp.eq.s32.totalorder %s19, 1
      %p51 = por %p49, %p50
      %p52 = scmp.ne.s32.totalorder %s41, %s42
      %p53 = scmp.eq.s32.totalorder %s19, 0
      %p54 = por %p52, %p53
      %p55 = scmp.ne.s32.totalorder %s41, %s42
      %p56 = scmp.eq.s32.totalorder %s20, 1
      %p57 = por %p55, %p56
      %p59 = scmp.ne.s32.totalorder %s42, %s58
      %p60 = scmp.eq.s32.totalorder %s20, 0
      %p61 = por %p59, %p60
      %s62 = ssub.s32 %s21, %s33
      %s63 = ssub.s32 %s22, %s29
      %s64 = sor.u32 %s62, %s63
      %p65 = scmp.eq.s32.totalorder %s64, 0
      %s67 = sadd.s32 %s66, 1
      %s68 = scalar_select %p65, %s66, %s67
      %p71 = pneg %p65
      %p72 = scmp.eq.s32.totalorder %s14, 1
      %p73 = por %p71, %p72
      %p74 = scmp.ne.s32.totalorder %s66, %s69
      %p75 = scmp.eq.s32.totalorder %s14, 0
      %p76 = por %p74, %p75
      %p77 = scmp.ne.s32.totalorder %s66, %s69
      %p78 = scmp.eq.s32.totalorder %s19, 1
      %p79 = por %p77, %p78
      %p80 = scmp.ne.s32.totalorder %s69, %s70
      %p81 = scmp.eq.s32.totalorder %s19, 0
      %p82 = por %p80, %p81
      %p83 = scmp.ne.s32.totalorder %s69, %s70
      %p84 = scmp.eq.s32.totalorder %s20, 1
      %p85 = por %p83, %p84
      %p87 = scmp.ne.s32.totalorder %s70, %s86
      %p88 = scmp.eq.s32.totalorder %s20, 0
      %p89 = por %p87, %p88
      %s90 = ssub.s32 %s21, %s33
      %p91 = scmp.eq.s32.totalorder %s90, 0
      %s93 = sadd.s32 %s92, 1
      %s94 = scalar_select %p91, %s92, %s93
      %p97 = pneg %p91
      %p98 = scmp.eq.s32.totalorder %s14, 1
      %p99 = por %p97, %p98
      %p100 = scmp.ne.s32.totalorder %s92, %s95
      %p101 = scmp.eq.s32.totalorder %s14, 0
      %p102 = por %p100, %p101
      %p103 = scmp.ne.s32.totalorder %s92, %s95
      %p104 = scmp.eq.s32.totalorder %s19, 1
      %p105 = por %p103, %p104
      %p106 = scmp.ne.s32.totalorder %s95, %s96
      %p107 = scmp.eq.s32.totalorder %s19, 0
      %p108 = por %p106, %p107
      %p109 = scmp.ne.s32.totalorder %s95, %s96
      %p110 = scmp.eq.s32.totalorder %s20, 1
      %p111 = por %p109, %p110
      %p113 = scmp.ne.s32.totalorder %s96, %s112
      %p114 = scmp.eq.s32.totalorder %s20, 0
      %p115 = por %p113, %p114
      %p116 = scmp.le.s32.totalorder 1, %s14
      %p117 = scmp.lt.s32.totalorder %s14, 3
      %p118 = pnand %p116, %p117
      %p119 = pneg %p118
      // Predicated region
      $region9: #{tpu_custom_call.1} parent=5 // pred_check
        _
      $region10: #{tpu_custom_call.1} parent=5 // pred_check_branch
        %121 = sbr.rel (%p118) target = $region12
      $region11: #{tpu_custom_call.1} parent=5 // pred_region
        %s122 = ssub.s32 %s14, 1
      $region12: #{tpu_custom_call.1} parent=5 // pred_fallthru
        _
      %p123 = scmp.lt.s32.totalorder %s14, 2
      // Predicated region
      $region13: #{tpu_custom_call.1} parent=5 // pred_check
        %p124 = pneg %p123
      $region14: #{tpu_custom_call.1} parent=5 // pred_check_branch
        %126 = sbr.rel (%p124) target = $region16
      $region15: #{tpu_custom_call.1} parent=5 // pred_region
        // Predicated region
        $region17: #{tpu_custom_call.1} parent=15 // pred_check
          %p127 = pneg %p48
        $region18: #{tpu_custom_call.1} parent=15 // pred_check_branch
          %129 = sbr.rel (%p127) target = $region20
        $region19: #{tpu_custom_call.1} parent=15 // pred_region
          %s130 = sand.u32 %s38, 1
          %s131 = scalar_lea.sflag [#allocation5], %s130
          %s132 = sand.u32 %s38, 1
          %s133 = smul.addr %s132, 8
          %s134 = scalar_lea.vmem [#allocation4], %s133
          %s136 = ssub.s32 128, 128
          %137 = vsyncadd %s131, %s136
          %s138 = sadd.s32 %s22, %s21
          %s139 = smul.addr %s138, 128
          %s140 = scalar_lea.hbm %s0, %s139
          %s142 = sshll.u32 %s134, 4
          %s143 = int_to_ptr.vmem [resolvable:$true] %s142
          %145 = dma.hbm_to_vmem [thread:$0]  %s140, 128, %s143, %s131
        $region20: #{tpu_custom_call.1} parent=15 // pred_fallthru
          _
        // Predicated region
        $region21: #{tpu_custom_call.1} parent=15 // pred_check
          %p146 = pneg %p76
        $region22: #{tpu_custom_call.1} parent=15 // pred_check_branch
          %148 = sbr.rel (%p146) target = $region24
        $region23: #{tpu_custom_call.1} parent=15 // pred_region
          %s149 = sand.u32 %s66, 1
          %s150 = scalar_lea.sflag [#allocation7], %s149
          %s151 = sand.u32 %s66, 1
          %s152 = smul.addr %s151, 8
          %s153 = scalar_lea.vmem [#allocation6], %s152
          %s155 = ssub.s32 128, 128
          %156 = vsyncadd %s150, %s155
          %s157 = sadd.s32 %s22, %s21
          %s158 = smul.addr %s157, 128
          %s159 = scalar_lea.hbm %s1, %s158
          %s161 = sshll.u32 %s153, 4
          %s162 = int_to_ptr.vmem [resolvable:$true] %s161
          %164 = dma.hbm_to_vmem [thread:$0]  %s159, 128, %s162, %s150
        $region24: #{tpu_custom_call.1} parent=15 // pred_fallthru
          _
      $region16: #{tpu_custom_call.1} parent=5 // pred_fallthru
        _
      %p165 = scmp.le.s32.totalorder 1, %s14
      %p166 = scmp.lt.s32.totalorder %s14, 3
      %p167 = pnand %p165, %p166
      %p168 = pneg %p167
      // Predicated region
      $region25: #{tpu_custom_call.1} parent=5 // pred_check
        _
      $region26: #{tpu_custom_call.1} parent=5 // pred_check_branch
        %170 = sbr.rel (%p167) target = $region28
      $region27: #{tpu_custom_call.1} parent=5 // pred_region
        %s171 = ssub.s32 %s14, 1
        %s172 = sand.u32 %s41, 1
        %s173 = scalar_lea.sflag [#allocation5], %s172
        %s174 = sand.u32 %s41, 1
        %s175 = smul.addr %s174, 8
        %s176 = scalar_lea.vmem [#allocation4], %s175
        // Predicated region
        $region29: #{tpu_custom_call.1} parent=27 // pred_check
          %p177 = pneg %p54
        $region30: #{tpu_custom_call.1} parent=27 // pred_check_branch
          %179 = sbr.rel (%p177) target = $region32
        $region31: #{tpu_custom_call.1} parent=27 // pred_region
          %180 = dma.done %s173, 128
        $region32: #{tpu_custom_call.1} parent=27 // pred_fallthru
          _
        %s181 = sand.u32 %s69, 1
        %s182 = scalar_lea.sflag [#allocation7], %s181
        %s183 = sand.u32 %s69, 1
        %s184 = smul.addr %s183, 8
        %s185 = scalar_lea.vmem [#allocation6], %s184
        // Predicated region
        $region33: #{tpu_custom_call.1} parent=27 // pred_check
          %p186 = pneg %p82
        $region34: #{tpu_custom_call.1} parent=27 // pred_check_branch
          %188 = sbr.rel (%p186) target = $region36
        $region35: #{tpu_custom_call.1} parent=27 // pred_region
          %189 = dma.done %s182, 128
        $region36: #{tpu_custom_call.1} parent=27 // pred_fallthru
          _
        %s190 = sand.u32 %s41, 1
        %s191 = scalar_lea.sflag [#allocation5], %s190
        %s192 = sand.u32 %s41, 1
        %s193 = smul.addr %s192, 8
        %s194 = scalar_lea.vmem [#allocation4], %s193
        %p195 = pneg %p54
        %p196 = pneg %p51
        %s197 = sand.u32 %s69, 1
        %s198 = scalar_lea.sflag [#allocation7], %s197
        %s199 = sand.u32 %s69, 1
        %s200 = smul.addr %s199, 8
        %s201 = scalar_lea.vmem [#allocation6], %s200
        %p202 = pneg %p82
        %p203 = pneg %p79
        %p204 = pneg %p108
        %p205 = pneg %p105
        %p206 = scmp.lt.s32.totalorder %s23, 1
        %s207 = scalar_select %p206, %s23, 1
        %s208 = scalar_lea.vmem %s2, %s207
        %p209 = scmp.lt.s32.totalorder %s23, 1
        %s210 = scalar_select %p209, %s23, 1
        %s211 = scalar_lea.vmem %s2, %s210
        %p212 = scmp.eq.s32.totalorder %s24, 0
        // Predicated region
        $region37: #{tpu_custom_call.1} parent=27 // pred_check
          %p213 = pneg %p212
        $region38: #{tpu_custom_call.1} parent=27 // pred_check_branch
          %215 = sbr.rel (%p213) target = $region40
        $region39: #{tpu_custom_call.1} parent=27 // pred_region
          %216 = vst [vmem:[#allocation2] sm:$0x1] 0.0
          %217 = vst [vmem:[#allocation3] sm:$0x1] 0.0
        $region40: #{tpu_custom_call.1} parent=27 // pred_fallthru
          _
        %v218 = vld [vmem:[%s176] sm:$0xff]
        %v219 = vld [vmem:[%s185] sm:$0xff]
        %v220 = vld [vmem:[#allocation2] sm:$0x1]
        %v221 = vmul.f32 %v218, %v219
        %v222 = vrot.slane %v221, 4
        %v223 = vadd.f32 %v221, %v222
        %v224 = vrot.slane %v223, 2
        %v225 = vadd.f32 %v223, %v224
        %v226 = vrot.slane %v225, 1
        %v227 = vadd.f32 %v225, %v226
        %v228 = vadd.f32 %v220, %v227
        %229 = vst [vmem:[#allocation2] sm:$0x1] %v228
        %v230 = vld [vmem:[#allocation3] sm:$0x1]
        %v231 = vadd.f32 %v218, %v219
        %v232 = vrot.slane %v231, 4
        %v233 = vadd.f32 %v231, %v232
        %v234 = vrot.slane %v233, 2
        %v235 = vadd.f32 %v233, %v234
        %v236 = vrot.slane %v235, 1
        %v237 = vadd.f32 %v235, %v236
        %v238 = vadd.f32 %v230, %v237
        %239 = vst [vmem:[#allocation3] sm:$0x1] %v238
        // Predicated region
        $region41: #{tpu_custom_call.1} parent=27 // pred_check
          %p240 = pneg %p212
        $region42: #{tpu_custom_call.1} parent=27 // pred_check_branch
          %242 = sbr.rel (%p240) target = $region44
        $region43: #{tpu_custom_call.1} parent=27 // pred_region
          %v243 = vld [vmem:[#allocation2] sm:$0x1]
          %vm244 = vcmask 1040384
          %v245 = vsel %vm244, %v243, 0.0
          %246 = vadd.xlane.f32.xlu0 %v245
          %v247 = vpop.xlane.xlu0 %246
          %v248 = vld [vmem:[#allocation3] sm:$0x1]
          %v249 = vsel %vm244, %v248, 0.0
          %250 = vadd.xlane.f32.xlu0 %v249
          %v251 = vpop.xlane.xlu0 %250
          %v252 = vsub.f32 %v251, %v247
          %v253 = vrcp.pop %v252
          %v254 = vmul.f32 %v247, %v253
          %v255 = vsub.f32 1.0, %v254
          %vm256 = vcmask 0
          %257 = vst.msk [vmem:[%s211] sm:$0x1] %vm256, %v255
        $region44: #{tpu_custom_call.1} parent=27 // pred_fallthru
          _
        %p258 = scmp.lt.s32.totalorder %s23, 1
        %s259 = scalar_select %p258, %s23, 1
        %s260 = scalar_lea.vmem %s2, %s259
        // Predicated region
        $region45: #{tpu_custom_call.1} parent=27 // pred_check
          %p261 = pneg %p105
        $region46: #{tpu_custom_call.1} parent=27 // pred_check_branch
          %263 = sbr.rel (%p261) target = $region48
        $region47: #{tpu_custom_call.1} parent=27 // pred_region
          _
        $region48: #{tpu_custom_call.1} parent=27 // pred_fallthru
          _
      $region28: #{tpu_custom_call.1} parent=5 // pred_fallthru
        _
      %p264 = scmp.le.s32.totalorder 2, %s14
      // Predicated region
      $region49: #{tpu_custom_call.1} parent=5 // pred_check
        %p265 = pneg %p264
      $region50: #{tpu_custom_call.1} parent=5 // pred_check_branch
        %267 = sbr.rel (%p265) target = $region52
      $region51: #{tpu_custom_call.1} parent=5 // pred_region
        %s268 = ssub.s32 %s14, 2
        // Predicated region
        $region53: #{tpu_custom_call.1} parent=51 // pred_check
          %p269 = pneg %p111
        $region54: #{tpu_custom_call.1} parent=51 // pred_check_branch
          %271 = sbr.rel (%p269) target = $region56
        $region55: #{tpu_custom_call.1} parent=51 // pred_region
          %p272 = scmp.lt.s32.totalorder %s25, 1
          %s273 = scalar_select %p272, %s25, 1
          %s274 = scalar_lea.vmem %s2, %s273
        $region56: #{tpu_custom_call.1} parent=51 // pred_fallthru
          _
      $region52: #{tpu_custom_call.1} parent=5 // pred_fallthru
        _
    $region6: #{tpu_custom_call.1} parent=1 // loop_footer
      %s18 = sadd.s32 1, %s14
    $region7: #{tpu_custom_call.1} parent=1 // loop_footer_branch
      %13 = sbr.rel target = $region3
    $region8: #{tpu_custom_call.1} parent=1 // loop_exit
      _
    %275 = vsyncpa [#allocation5], 1
    %s276 = scalar_lea.sflag [#allocation5], 1
    %277 = vsyncpa %s276, 1
    %278 = vsyncpa [#allocation7], 1
    %s279 = scalar_lea.sflag [#allocation7], 1
    %280 = vsyncpa %s279, 1

</llo_original>
